<compile_context>
chip_gen: v7x
topology: tpu7x:2x2x1
jax: 0.10.0
libtpu: 0.0.40
codegen_flags: <defaults>
</compile_context>

<pallas_src>
import functools

import jax
import jax.numpy as jnp
from jax.experimental import pallas as pl
from jax.experimental.pallas import tpu as pltpu


# ---------------------------------------------------------------------------
# Kernels
# ---------------------------------------------------------------------------
def _bn_fused_kernel(x_ref, w_ref, b_ref, o_ref, *, eps, count):
    """Single-pass BN: whole (N, C, HW) tensor resident in VMEM."""
    x = x_ref[...].astype(jnp.float32)                       # (N, C, HW)
    c = x.shape[1]
    inv_count = jnp.float32(1.0 / count)
    # Reduce lanes first (XLU), then the cheap leading axis.
    s = jnp.sum(jnp.sum(x, axis=2, keepdims=True), axis=0, keepdims=True)
    ss = jnp.sum(jnp.sum(x * x, axis=2, keepdims=True), axis=0, keepdims=True)
    mean = s * inv_count                                      # (1, C, 1)
    var = jnp.maximum(ss * inv_count - mean * mean, 0.0)
    inv = jax.lax.rsqrt(var + jnp.float32(eps))
    w = w_ref[...].reshape(1, c, 1)
    b = b_ref[...].reshape(1, c, 1)
    scale = inv * w
    shift = b - mean * scale
    o_ref[...] = (x * scale + shift).astype(o_ref.dtype)


def _bn_stats_kernel(x_ref, sum_ref, sumsq_ref, *, hw, thw, need_mask):
    """Per-(n, channel) partial sum / sum-of-squares over the HW-tile axis."""
    t_i = pl.program_id(1)

    @pl.when(t_i == 0)
    def _():
        sum_ref[...] = jnp.zeros_like(sum_ref)
        sumsq_ref[...] = jnp.zeros_like(sumsq_ref)

    x = x_ref[0].astype(jnp.float32)                          # (C, THW)
    if need_mask:  # last spatial tile may be partial; zero-out invalid lanes
        lane = jax.lax.broadcasted_iota(jnp.int32, x.shape, 1)
        x = jnp.where(t_i * thw + lane < hw, x, jnp.float32(0.0))
    sum_ref[0] += jnp.sum(x, axis=1, keepdims=True)           # (C, 1)
    sumsq_ref[0] += jnp.sum(x * x, axis=1, keepdims=True)     # (C, 1)


def _bn_apply_kernel(x_ref, scale_ref, shift_ref, o_ref):
    """y = x * scale + shift with precomputed per-channel scale/shift."""
    x = x_ref[0].astype(jnp.float32)                          # (C, THW)
    y = x * scale_ref[...] + shift_ref[...]                   # (C, 1) broadcast
    o_ref[0] = y.astype(o_ref.dtype)


# ---------------------------------------------------------------------------
# Wrapper
# ---------------------------------------------------------------------------
def _choose_hw_tile(hw, c, target_bytes=2 * 1024 * 1024):
    """Largest lane-dense spatial tile keeping a (C, THW) f32 tile ~2 MiB."""
    max_thw = max(128, ((target_bytes // (c * 4)) // 128) * 128)
    return hw if hw <= max_thw else max_thw


def batchnorm2d_pallas(x_nchw, weight, bias, eps=1e-5, *,
                       hw_tile=None, single_pass=None):
    """Training-mode BatchNorm2d over NCHW input (batch statistics)."""
    N, C, H, W = x_nchw.shape
    HW = H * W
    x3 = x_nchw.reshape(N, C, HW)  # free relayout: same memory order as NCHW
    w2 = weight.astype(jnp.float32).reshape(C, 1)
    b2 = bias.astype(jnp.float32).reshape(C, 1)
    vmem_limit = 32 * 1024 * 1024  # above v5e's 16 MiB default; safe on v7x

    x_bytes = N * C * HW * x_nchw.dtype.itemsize
    if single_pass is None:
        single_pass = x_bytes <= 4 * 1024 * 1024

    # ---- fast path: whole tensor fits in VMEM -> one read + one write ------
    if single_pass:
        kern = functools.partial(_bn_fused_kernel, eps=eps, count=float(N * HW))
        y3 = pl.pallas_call(
            kern,
            out_shape=jax.ShapeDtypeStruct((N, C, HW), x_nchw.dtype),
            grid=(1,),
            in_specs=[pl.BlockSpec((N, C, HW), lambda i: (0, 0, 0)),
                      pl.BlockSpec((C, 1), lambda i: (0, 0)),
                      pl.BlockSpec((C, 1), lambda i: (0, 0))],
            out_specs=pl.BlockSpec((N, C, HW), lambda i: (0, 0, 0)),
            compiler_params=pltpu.CompilerParams(vmem_limit_bytes=vmem_limit),
        )(x3, w2, b2)
        return y3.reshape(N, C, H, W)

    # ---- pass 1: streaming per-(n, channel) partial statistics -------------
    thw = hw_tile if hw_tile is not None else _choose_hw_tile(HW, C)
    n_hw_tiles = pl.cdiv(HW, thw)
    need_mask = (HW % thw) != 0

    stats_kernel = functools.partial(
        _bn_stats_kernel, hw=HW, thw=thw, need_mask=need_mask)
    part_spec = pl.BlockSpec((1, C, 1), lambda n, t: (n, 0, 0))
    s_part, ss_part = pl.pallas_call(
        stats_kernel,
        out_shape=(jax.ShapeDtypeStruct((N, C, 1), jnp.float32),
                   jax.ShapeDtypeStruct((N, C, 1), jnp.float32)),
        grid=(N, n_hw_tiles),
        in_specs=[pl.BlockSpec((1, C, thw), lambda n, t: (n, 0, t))],
        out_specs=(part_spec, part_spec),
        compiler_params=pltpu.CompilerParams(
            dimension_semantics=("parallel", "arbitrary"),
            vmem_limit_bytes=vmem_limit),
    )(x3)

    # ---- fold statistics + affine params into per-channel scale / shift ----
    count = jnp.float32(N * HW)
    s = jnp.sum(s_part, axis=0)                               # (C, 1)
    ss = jnp.sum(ss_part, axis=0)                             # (C, 1)
    mean = s / count
    # Biased variance via E[x^2] - mean^2 (f32 accumulation); clamp >= 0 to
    # guard against cancellation producing a tiny negative value.
    var = jnp.maximum(ss / count - mean * mean, 0.0)
    inv = jax.lax.rsqrt(var + jnp.float32(eps))
    scale = inv * w2
    shift = b2 - mean * scale

    # ---- pass 2: y = x * scale + shift (streaming, embarrassingly parallel) -
    y3 = pl.pallas_call(
        _bn_apply_kernel,
        out_shape=jax.ShapeDtypeStruct((N, C, HW), x_nchw.dtype),
        grid=(N, n_hw_tiles),
        in_specs=[pl.BlockSpec((1, C, thw), lambda n, t: (n, 0, t)),
                  pl.BlockSpec((C, 1), lambda n, t: (0, 0)),
                  pl.BlockSpec((C, 1), lambda n, t: (0, 0))],
        out_specs=pl.BlockSpec((1, C, thw), lambda n, t: (n, 0, t)),
        compiler_params=pltpu.CompilerParams(
            dimension_semantics=("parallel", "parallel"),
            vmem_limit_bytes=vmem_limit),
    )(x3, scale, shift)

    return y3.reshape(N, C, H, W)


# ---------------------------------------------------------------------------
# Module port
# ---------------------------------------------------------------------------
class SwitchableBatchNorm2dPallas:
    """JAX/Pallas port of SwitchableBatchNorm2d.

    Holds one (weight, bias) pair per entry of num_features_list and, at
    forward time, picks the BN whose index matches width_mult in
    width_mult_list (static Python selection, as in the PyTorch module).
    """

    def __init__(self, num_features_list, width_mult_list):
        if not isinstance(num_features_list, (list, tuple)):
            num_features_list = [num_features_list]
        self.num_features_list = [int(i) for i in num_features_list]
        self.num_features = max(self.num_features_list)
        self.width_mult_list = list(width_mult_list)
        self.width_mult = 1.0
        self.eps = 1e-5
        # Deterministic parameter init (nn.BatchNorm2d default is weight=1,
        # bias=0; small deterministic perturbations so the affine path is
        # actually exercised).
        self.params = []
        for c in self.num_features_list:
            w = 1.0 + 0.1 * jnp.arange(c, dtype=jnp.float32)
            b = 0.05 * jnp.arange(c, dtype=jnp.float32)
            self.params.append((w, b))
        # TODO(synk): running_mean/running_var buffer updates (a training-time
        # side effect) are not modeled; they do not affect the forward output.

    def __call__(self, x_nchw):
        idx = self.width_mult_list.index(self.width_mult)
        w, b = self.params[idx]
        assert x_nchw.shape[1] == self.num_features_list[idx]
        return batchnorm2d_pallas(x_nchw, w, b, eps=self.eps)


# ---------------------------------------------------------------------------
# Reference & test
# ---------------------------------------------------------------------------
def _reference_bn(x_nchw, weight, bias, eps=1e-5):
    x = x_nchw.astype(jnp.float32)
    mean = jnp.mean(x, axis=(0, 2, 3), keepdims=True)
    var = jnp.mean((x - mean) ** 2, axis=(0, 2, 3), keepdims=True)
    w = weight.reshape(1, -1, 1, 1)
    b = bias.reshape(1, -1, 1, 1)
    return ((x - mean) * jax.lax.rsqrt(var + eps) * w + b).astype(x_nchw.dtype)


if __name__ == "__main__":
    key = jax.random.PRNGKey(0)
    # width_mult_list / num_features_list consistent with the slimmable setup.
    width_mult_list = [0.5, 1.0]
    num_features_list = [2, 4]
    mod = SwitchableBatchNorm2dPallas(num_features_list, width_mult_list)
    mod.width_mult = 1.0  # selects the BN with 4 features

    # --- main example (module-consistent shape; fused single-pass path) -----
    x = jax.random.normal(key, (2, 4, 16, 16), dtype=jnp.float32)
    y = jax.block_until_ready(mod(x))
    idx = width_mult_list.index(mod.width_mult)
    w, b = mod.params[idx]
    y_ref = _reference_bn(x, w, b, eps=mod.eps)
    assert y.shape == x.shape
    assert jnp.allclose(y, y_ref, atol=1e-4, rtol=1e-4)

    # --- also exercise the streaming two-pass path (tiled + masked tile) ----
    key2 = jax.random.PRNGKey(1)
    x2 = jax.random.normal(key2, (2, 8, 32, 32), dtype=jnp.float32)
    w2 = 1.0 + 0.1 * jnp.arange(8, dtype=jnp.float32)
    b2 = 0.05 * jnp.arange(8, dtype=jnp.float32)
    y2 = jax.block_until_ready(
        batchnorm2d_pallas(x2, w2, b2, eps=1e-5,
                           single_pass=False, hw_tile=384))  # 1024 % 384 != 0
    y2_ref = _reference_bn(x2, w2, b2, eps=1e-5)
    assert jnp.allclose(y2, y2_ref, atol=1e-4, rtol=1e-4)

    print("KERNEL_OK")
</pallas_src>

<mosaic_0001>
module attributes {stable_mosaic.version = 11 : i64} {
  func.func @_bn_fused_kernel(%arg0: i32, %arg1: memref<2x4x256xf32, #tpu.memory_space<vmem>>, %arg2: memref<4x1xf32, #tpu.memory_space<vmem>>, %arg3: memref<4x1xf32, #tpu.memory_space<vmem>>, %arg4: memref<2x4x256xf32, #tpu.memory_space<vmem>>) attributes {dimension_semantics = [#tpu.dimension_semantics<arbitrary>], iteration_bounds = array<i64: 1>, scalar_prefetch = 0 : i64, scratch_operands = 0 : i64, tpu.core_type = #tpu.core_type<tc>, window_params = [{pipeline_mode = #tpu.pipeline_mode<synchronous>, transform_indices = @transform_0, window_bounds = array<i64: 2, 4, 256>}, {pipeline_mode = #tpu.pipeline_mode<synchronous>, transform_indices = @transform_1, window_bounds = array<i64: 4, 1>}, {pipeline_mode = #tpu.pipeline_mode<synchronous>, transform_indices = @transform_2, window_bounds = array<i64: 4, 1>}, {pipeline_mode = #tpu.pipeline_mode<synchronous>, transform_indices = @transform_3, window_bounds = array<i64: 2, 4, 256>}]} {
    %c0 = arith.constant 0 : index
    %c0_0 = arith.constant 0 : index
    %c0_1 = arith.constant 0 : index
    %0 = vector.load %arg1[%c0, %c0_0, %c0_1] : memref<2x4x256xf32, #tpu.memory_space<vmem>>, vector<2x4x256xf32>
    %cst = arith.constant dense<0.000000e+00> : vector<2x4xf32>
    %1 = vector.multi_reduction <add>, %0, %cst [2] : vector<2x4x256xf32> to vector<2x4xf32>
    %2 = vector.shape_cast %1 : vector<2x4xf32> to vector<2x4x1xf32>
    %cst_2 = arith.constant dense<0.000000e+00> : vector<4x1xf32>
    %3 = vector.multi_reduction <add>, %2, %cst_2 [0] : vector<2x4x1xf32> to vector<4x1xf32>
    %4 = vector.shape_cast %3 : vector<4x1xf32> to vector<1x4x1xf32>
    %5 = arith.mulf %0, %0 : vector<2x4x256xf32>
    %cst_3 = arith.constant dense<0.000000e+00> : vector<2x4xf32>
    %6 = vector.multi_reduction <add>, %5, %cst_3 [2] : vector<2x4x256xf32> to vector<2x4xf32>
    %7 = vector.shape_cast %6 : vector<2x4xf32> to vector<2x4x1xf32>
    %cst_4 = arith.constant dense<0.000000e+00> : vector<4x1xf32>
    %8 = vector.multi_reduction <add>, %7, %cst_4 [0] : vector<2x4x1xf32> to vector<4x1xf32>
    %9 = vector.shape_cast %8 : vector<4x1xf32> to vector<1x4x1xf32>
    %cst_5 = arith.constant 0.001953125 : f32
    %10 = vector.broadcast %cst_5 : f32 to vector<1x4x1xf32>
    %11 = arith.mulf %4, %10 : vector<1x4x1xf32>
    %cst_6 = arith.constant 0.001953125 : f32
    %12 = vector.broadcast %cst_6 : f32 to vector<1x4x1xf32>
    %13 = arith.mulf %9, %12 : vector<1x4x1xf32>
    %14 = arith.mulf %11, %11 : vector<1x4x1xf32>
    %15 = arith.subf %13, %14 : vector<1x4x1xf32>
    %cst_7 = arith.constant 0.000000e+00 : f32
    %16 = vector.broadcast %cst_7 : f32 to vector<1x4x1xf32>
    %17 = arith.maximumf %15, %16 : vector<1x4x1xf32>
    %cst_8 = arith.constant 9.99999974E-6 : f32
    %18 = vector.broadcast %cst_8 : f32 to vector<1x4x1xf32>
    %19 = arith.addf %17, %18 : vector<1x4x1xf32>
    %20 = math.rsqrt %19 : vector<1x4x1xf32>
    %c0_9 = arith.constant 0 : index
    %c0_10 = arith.constant 0 : index
    %21 = vector.load %arg2[%c0_9, %c0_10] : memref<4x1xf32, #tpu.memory_space<vmem>>, vector<4x1xf32>
    %22 = vector.shape_cast %21 : vector<4x1xf32> to vector<1x4x1xf32>
    %c0_11 = arith.constant 0 : index
    %c0_12 = arith.constant 0 : index
    %23 = vector.load %arg3[%c0_11, %c0_12] : memref<4x1xf32, #tpu.memory_space<vmem>>, vector<4x1xf32>
    %24 = vector.shape_cast %23 : vector<4x1xf32> to vector<1x4x1xf32>
    %25 = arith.mulf %20, %22 : vector<1x4x1xf32>
    %26 = arith.mulf %11, %25 : vector<1x4x1xf32>
    %27 = arith.subf %24, %26 : vector<1x4x1xf32>
    %28 = vector.broadcast %25 : vector<1x4x1xf32> to vector<2x4x256xf32>
    %29 = arith.mulf %0, %28 : vector<2x4x256xf32>
    %30 = vector.broadcast %27 : vector<1x4x1xf32> to vector<2x4x256xf32>
    %31 = arith.addf %29, %30 : vector<2x4x256xf32>
    %c0_13 = arith.constant 0 : index
    %c0_14 = arith.constant 0 : index
    %c0_15 = arith.constant 0 : index
    %32 = vector.load %arg4[%c0_13, %c0_14, %c0_15] : memref<2x4x256xf32, #tpu.memory_space<vmem>>, vector<2x4x256xf32>
    tpu.vector_store %arg4[%c0_13, %c0_14, %c0_15], %31 {strides = array<i32>} : memref<2x4x256xf32, #tpu.memory_space<vmem>>, vector<2x4x256xf32>,
    return
  }
  func.func @transform_0(%arg0: i32) -> (i32, i32, i32) {
    %c0_i32 = arith.constant 0 : i32
    %c0_i32_0 = arith.constant 0 : i32
    %c0_i32_1 = arith.constant 0 : i32
    %c0_i32_2 = arith.constant 0 : i32
    return %c0_i32, %c0_i32_0, %c0_i32_1 : i32, i32, i32
  }
  func.func @transform_1(%arg0: i32) -> (i32, i32) {
    %c0_i32 = arith.constant 0 : i32
    %c0_i32_0 = arith.constant 0 : i32
    %c0_i32_1 = arith.constant 0 : i32
    return %c0_i32, %c0_i32_0 : i32, i32
  }
  func.func @transform_2(%arg0: i32) -> (i32, i32) {
    %c0_i32 = arith.constant 0 : i32
    %c0_i32_0 = arith.constant 0 : i32
    %c0_i32_1 = arith.constant 0 : i32
    return %c0_i32, %c0_i32_0 : i32, i32
  }
  func.func @transform_3(%arg0: i32) -> (i32, i32, i32) {
    %c0_i32 = arith.constant 0 : i32
    %c0_i32_0 = arith.constant 0 : i32
    %c0_i32_1 = arith.constant 0 : i32
    %c0_i32_2 = arith.constant 0 : i32
    return %c0_i32, %c0_i32_0, %c0_i32_1 : i32, i32, i32
  }
}

</mosaic_0001>

<llo_original>
// kernel: tpu_custom_call.1
$region0: #{tpu_custom_call.1}
  #allocation0 [shape = 'u32[]', space=smem, size = 0x4, offset = 0x4, fixed_abs, tag = 'smem constant byte address 0x4 - core index']
  #allocation1 [shape = 'u32[144,128]{1,0:T(1,128)}', space=vmem, size = 0x12000, scoped, tag = 'internal scratch']
  %s0 = inlined_call_operand.hbm [shape: f32[2,4,256], index: 0, kind: input, shape index: {}]
  %s1 = inlined_call_operand.vmem [shape: f32[4,1], index: 1, kind: input, shape index: {}]
  %s2 = inlined_call_operand.vmem [shape: f32[4,1], index: 2, kind: input, shape index: {}]
  %s3 = inlined_call_operand.hbm [shape: f32[2,4,256], index: 3, kind: output, shape index: {}]
  %s4 = sld [smem:[#allocation0]]
  $region26: #{tpu_custom_call.1} parent=0
    _
  %s6 = ssub.s32 1, %s4
  %s7 = scalar_select 0, %s6, %s4
  $region1: #{tpu_custom_call.1} parent=0
    #allocation2 [shape = 'u8[8192]{0}', space=vmem, size = 0x2000, scoped, tag = 'input window, operand 0, single buffered']
    #allocation3 [shape = 's32[1]{0}', space=sflag, size = 0x4, scoped, tag = 'scoped memory for tpu_custom_call.1']
    #allocation4 [shape = 's32[1]{0}', space=sflag, size = 0x4, scoped, tag = 'scoped memory for tpu_custom_call.1']
    #allocation5 [shape = 'u8[8192]{0}', space=vmem, size = 0x2000, scoped, tag = 'output window, operand 0, single buffered']
    %8 = vsyncpa [#allocation3], 0
    %9 = vsyncpa [#allocation4], 0
    // Predicated region
    $region2: #{tpu_custom_call.1} parent=1 // pred_check
      _
    $region3: #{tpu_custom_call.1} parent=1 // pred_check_branch
      %11 = sbr.rel (0) target = $region5
    $region4: #{tpu_custom_call.1} parent=1 // pred_region
      %s13 = ssub.s32 256, 256
      %14 = vsyncadd [#allocation3], %s13
      %s15 = sshll.u32 [#allocation2], 4
      %s16 = int_to_ptr.vmem [resolvable:$true] %s15
      %21 = dma.hbm_to_vmem [thread:$0]  %s0, 256, %s16, [#allocation3], 128, 128, 8
    $region5: #{tpu_custom_call.1} parent=1 // pred_fallthru
      _
    // Predicated region
    $region6: #{tpu_custom_call.1} parent=1 // pred_check
      _
    $region7: #{tpu_custom_call.1} parent=1 // pred_check_branch
      %23 = sbr.rel (0) target = $region9
    $region8: #{tpu_custom_call.1} parent=1 // pred_region
      _
    $region9: #{tpu_custom_call.1} parent=1 // pred_fallthru
      _
    // Predicated region
    $region10: #{tpu_custom_call.1} parent=1 // pred_check
      _
    $region11: #{tpu_custom_call.1} parent=1 // pred_check_branch
      %25 = sbr.rel (0) target = $region13
    $region12: #{tpu_custom_call.1} parent=1 // pred_region
      _
    $region13: #{tpu_custom_call.1} parent=1 // pred_fallthru
      _
    // Predicated region
    $region14: #{tpu_custom_call.1} parent=1 // pred_check
      _
    $region15: #{tpu_custom_call.1} parent=1 // pred_check_branch
      %27 = sbr.rel (0) target = $region17
    $region16: #{tpu_custom_call.1} parent=1 // pred_region
      %28 = dma.done [#allocation3], 256
    $region17: #{tpu_custom_call.1} parent=1 // pred_fallthru
      _
    %v29 = vld [vmem:[#allocation2] sm:$0xff]
    %v30 = vld [vmem:[#allocation2 + $0x8] sm:$0xff]
    %v33 = vcombine.high %v29, %v29
    %v34 = vcombine.high %v30, %v30
    %vm37 = vcmask 1043456
    %v38 = vsel %vm37, %v29, 0.0
    %v39 = vsel %vm37, %v33, 0.0
    %v40 = vadd.f32 %v38, %v39
    %41 = vadd.xlane.f32.xlu0 %v40
    %v42 = vpop.xlane.xlu0 %41
    %v43 = vsel %vm37, %v30, 0.0
    %v44 = vsel %vm37, %v34, 0.0
    %v45 = vadd.f32 %v43, %v44
    %46 = vadd.xlane.f32.xlu0 %v45
    %v47 = vpop.xlane.xlu0 %46
    %v48 = vsel %vm37, %v42, 0.0
    %v49 = vsel %vm37, %v47, 0.0
    %v50 = vadd.f32 %v48, %v49
    %v51 = vmul.f32 %v29, %v29
    %v52 = vmul.f32 %v30, %v30
    %v55 = vcombine.high %v51, %v51
    %v56 = vcombine.high %v52, %v52
    %v59 = vsel %vm37, %v51, 0.0
    %v60 = vsel %vm37, %v55, 0.0
    %v61 = vadd.f32 %v59, %v60
    %62 = vadd.xlane.f32.xlu0 %v61
    %v63 = vpop.xlane.xlu0 %62
    %v64 = vsel %vm37, %v52, 0.0
    %v65 = vsel %vm37, %v56, 0.0
    %v66 = vadd.f32 %v64, %v65
    %67 = vadd.xlane.f32.xlu0 %v66
    %v68 = vpop.xlane.xlu0 %67
    %v69 = vsel %vm37, %v63, 0.0
    %v70 = vsel %vm37, %v68, 0.0
    %v71 = vadd.f32 %v69, %v70
    %v72 = vmul.f32 %v50, 0.001953125
    %v73 = vmul.f32 %v71, 0.001953125
    %v74 = vmul.f32 %v72, %v72
    %v75 = vsub.f32 %v73, %v74
    %v76 = vmax.f32 %v75, 0.0
    %v77 = vadd.f32 %v76, 1e-05
    %v78 = vrsqrt.pop %v77
    %v79 = vld [vmem:[%s1] sm:$0xf]
    %v80 = vld [vmem:[%s2] sm:$0xf]
    %v81 = vmul.f32 %v78, %v79
    %v82 = vmul.f32 %v72, %v81
    %v83 = vsub.f32 %v80, %v82
    %85 = vset.pattern.permute.xlu0 0
    %86 = vperm.xlu0 %85, %v81
    %v87 = vpop.permute.xlu0 %86
    %v89 = vunpack.c.l.s4 839922192
    %v90 = vunpack.c.0.s8 %v89
    %v91 = vlaneseq
    %v92 = vshrl.u32 %v91, 7
    %v93 = vsub.s32 %v90, %v92
    %v94 = vrot.slane %v87, %v93
    %v96 = vmul.f32 %v29, %v94
    %v97 = vmul.f32 %v30, %v94
    %99 = vset.pattern.permute.xlu0 0
    %100 = vperm.xlu0 %99, %v83
    %v101 = vpop.permute.xlu0 %100
    %v103 = vunpack.c.l.s4 839922192
    %v104 = vunpack.c.0.s8 %v103
    %v105 = vlaneseq
    %v106 = vshrl.u32 %v105, 7
    %v107 = vsub.s32 %v104, %v106
    %v108 = vrot.slane %v101, %v107
    %v110 = vadd.f32 %v96, %v108
    %v111 = vadd.f32 %v97, %v108
    %112 = vst [vmem:[#allocation5] sm:$0xff] %v110
    %113 = vst [vmem:[#allocation5 + $0x8] sm:$0xff] %v111
    // Predicated region
    $region18: #{tpu_custom_call.1} parent=1 // pred_check
      _
    $region19: #{tpu_custom_call.1} parent=1 // pred_check_branch
      %115 = sbr.rel (0) target = $region21
    $region20: #{tpu_custom_call.1} parent=1 // pred_region
      %s117 = ssub.s32 256, 256
      %118 = vsyncadd [#allocation4], %s117
      %s119 = sshll.u32 [#allocation5], 4
      %s120 = int_to_ptr.vmem [resolvable:$true] %s119
      %125 = dma.vmem_to_hbm [thread:$0]  %s120, 256, %s3, [#allocation4], 128, 128, 8
    $region21: #{tpu_custom_call.1} parent=1 // pred_fallthru
      _
    // Predicated region
    $region22: #{tpu_custom_call.1} parent=1 // pred_check
      _
    $region23: #{tpu_custom_call.1} parent=1 // pred_check_branch
      %127 = sbr.rel (0) target = $region25
    $region24: #{tpu_custom_call.1} parent=1 // pred_region
      %128 = dma.done [#allocation4], 256
    $region25: #{tpu_custom_call.1} parent=1 // pred_fallthru
      _
    %129 = vsyncpa [#allocation3], 1
    %130 = vsyncpa [#allocation4], 1

</llo_original>
